<compile_context>
chip_gen: v5e
topology: v5e:2x2
jax: 0.10.0
libtpu: 0.0.40
codegen_flags: <defaults>
</compile_context>

<pallas_src>
import jax
import jax.numpy as jnp
from jax.experimental import pallas as pl
from jax.experimental.pallas import tpu as pltpu


def _round_up(x, m):
    return (x + m - 1) // m * m


def mlp_kernel(x_ref, w1_ref, b1_ref, w2_ref, b2_ref, w3_ref, b3_ref, o_ref, acc_ref):
    """Fused 3-layer MLP. Grid = (batch tiles, K tiles of the flattened features)."""
    k = pl.program_id(1)

    @pl.when(k == 0)
    def _():
        acc_ref[...] = jnp.zeros_like(acc_ref)

    # Layer 1 partial product, accumulated in f32 over the K (feature) axis.
    acc_ref[...] += jnp.dot(x_ref[...], w1_ref[...],
                            preferred_element_type=jnp.float32)

    @pl.when(k == pl.num_programs(1) - 1)
    def _():
        h1 = jnp.maximum(acc_ref[...] + b1_ref[...], 0.0).astype(jnp.bfloat16)
        h2 = jnp.dot(h1, w2_ref[...], preferred_element_type=jnp.float32) + b2_ref[...]
        h2 = jnp.maximum(h2, 0.0).astype(jnp.bfloat16)
        logits = jnp.dot(h2, w3_ref[...], preferred_element_type=jnp.float32) + b3_ref[...]
        o_ref[...] = logits.astype(o_ref.dtype)


def mlp_forward(x_nchw, params, *, block_b=None, block_k=None):
    """x_nchw: [B, C, H, W] float32. Returns logits [B, num_classes] float32."""
    w1, b1, w2, b2, w3, b3 = params          # w: [in, out] f32, b: [1, out] f32
    B = x_nchw.shape[0]
    x = x_nchw.reshape(B, -1).astype(jnp.float32)   # torch.flatten(x, start_dim=1)
    F = x.shape[1]
    H1, H2, C = w1.shape[1], w2.shape[1], w3.shape[1]

    # --- lane padding (done once, outside the kernel) ---
    H1p = _round_up(H1, 128)
    H2p = _round_up(H2, 128)
    Cp = _round_up(C, 128)

    # --- K (feature) tiling: keep W1 tiles pipelined instead of one huge block ---
    if block_k is not None:
        tk = block_k
        Fp = _round_up(F, tk)
    elif F <= 2048:
        Fp = _round_up(F, 128)
        tk = Fp
    else:
        tk = 1024
        Fp = _round_up(F, tk)

    # --- batch tiling: multiple of 8 sublanes, big enough to amortize grid-step cost ---
    Bp = _round_up(B, 8)
    bm = min(512, Bp) if block_b is None else block_b

    # Zero-pad (padding contributes nothing: ReLU(0)=0, zero weight rows/cols add 0).
    xp = jnp.zeros((Bp, Fp), jnp.bfloat16).at[:B, :F].set(x.astype(jnp.bfloat16))
    w1p = jnp.zeros((Fp, H1p), jnp.bfloat16).at[:F, :H1].set(w1.astype(jnp.bfloat16))
    b1p = jnp.zeros((1, H1p), jnp.float32).at[:, :H1].set(b1)
    w2p = jnp.zeros((H1p, H2p), jnp.bfloat16).at[:H1, :H2].set(w2.astype(jnp.bfloat16))
    b2p = jnp.zeros((1, H2p), jnp.float32).at[:, :H2].set(b2)
    w3p = jnp.zeros((H2p, Cp), jnp.bfloat16).at[:H2, :C].set(w3.astype(jnp.bfloat16))
    b3p = jnp.zeros((1, Cp), jnp.float32).at[:, :C].set(b3)

    nb = pl.cdiv(Bp, bm)
    nk = Fp // tk

    # Explicit VMEM budget (double-buffered x/W1/out + resident small weights + acc),
    # clamped so it stays safe on v7x's 64 MiB physical VMEM.
    est = (2 * bm * tk * 2          # x tiles (bf16, double buffered)
           + 2 * tk * H1p * 2       # W1 tiles
           + 2 * bm * Cp * 4        # output tiles (f32)
           + 2 * (H1p * H2p * 2 + H2p * Cp * 2)          # W2, W3
           + 2 * 4 * (H1p + H2p + Cp)                    # biases
           + bm * H1p * 4)          # f32 accumulator scratch
    vmem_limit = int(min(48 << 20, max(32 << 20, int(1.5 * est) + (4 << 20))))

    cost = pl.CostEstimate(
        flops=2 * Bp * (Fp * H1p + H1p * H2p + H2p * Cp),
        transcendentals=0,
        bytes_accessed=(Bp * Fp * 2 + Fp * H1p * 2 + H1p * H2p * 2 + H2p * Cp * 2
                        + Bp * Cp * 4),
    )

    out = pl.pallas_call(
        mlp_kernel,
        out_shape=jax.ShapeDtypeStruct((Bp, Cp), jnp.float32),
        grid_spec=pltpu.PrefetchScalarGridSpec(
            num_scalar_prefetch=0,
            grid=(nb, nk),
            in_specs=[
                pl.BlockSpec((bm, tk), lambda i, k: (i, k)),    # x tile
                pl.BlockSpec((tk, H1p), lambda i, k: (k, 0)),   # W1 tile (K-tiled)
                pl.BlockSpec((1, H1p), lambda i, k: (0, 0)),    # b1
                pl.BlockSpec((H1p, H2p), lambda i, k: (0, 0)),  # W2 (resident)
                pl.BlockSpec((1, H2p), lambda i, k: (0, 0)),    # b2
                pl.BlockSpec((H2p, Cp), lambda i, k: (0, 0)),   # W3 (resident)
                pl.BlockSpec((1, Cp), lambda i, k: (0, 0)),     # b3
            ],
            out_specs=pl.BlockSpec((bm, Cp), lambda i, k: (i, 0)),
            scratch_shapes=[pltpu.VMEM((bm, H1p), jnp.float32)],
        ),
        compiler_params=pltpu.CompilerParams(
            dimension_semantics=("parallel", "arbitrary"),
            vmem_limit_bytes=vmem_limit,
        ),
        cost_estimate=cost,
    )(xp, w1p, b1p, w2p, b2p, w3p, b3p)

    return out[:B, :C]


def init_params(key, num_features, seq_len, num_classes):
    """Deterministic init matching the PyTorch module's parameter shapes
    (nn.Linear default Kaiming-uniform fan_in scaling)."""
    ks = jax.random.split(key, 6)

    def linear(kw, kb, fan_in, fan_out):
        bound = 1.0 / jnp.sqrt(fan_in)
        w = jax.random.uniform(kw, (fan_in, fan_out), jnp.float32, -bound, bound)
        b = jax.random.uniform(kb, (1, fan_out), jnp.float32, -bound, bound)
        return w, b

    w1, b1 = linear(ks[0], ks[1], num_features, seq_len)
    w2, b2 = linear(ks[2], ks[3], seq_len, 25)
    w3, b3 = linear(ks[4], ks[5], 25, num_classes)
    return (w1, b1, w2, b2, w3, b3)


def mlp_reference_f32(x_nchw, params):
    w1, b1, w2, b2, w3, b3 = params
    x = x_nchw.reshape(x_nchw.shape[0], -1)
    h1 = jnp.maximum(x @ w1 + b1, 0.0)
    h2 = jnp.maximum(h1 @ w2 + b2, 0.0)
    return h2 @ w3 + b3


def mlp_reference_bf16(x_nchw, params):
    """Same bf16-input / f32-accumulate recipe as the kernel, for a tight check."""
    w1, b1, w2, b2, w3, b3 = params
    x = x_nchw.reshape(x_nchw.shape[0], -1).astype(jnp.bfloat16)
    h1 = jnp.dot(x, w1.astype(jnp.bfloat16), preferred_element_type=jnp.float32) + b1
    h1 = jnp.maximum(h1, 0.0).astype(jnp.bfloat16)
    h2 = jnp.dot(h1, w2.astype(jnp.bfloat16), preferred_element_type=jnp.float32) + b2
    h2 = jnp.maximum(h2, 0.0).astype(jnp.bfloat16)
    return jnp.dot(h2, w3.astype(jnp.bfloat16), preferred_element_type=jnp.float32) + b3


if __name__ == "__main__":
    key = jax.random.PRNGKey(0)
    k_x, k_p = jax.random.split(key)

    # Small shapes consistent with the module: flatten([B,C,H,W]) -> num_features = C*H*W
    B, Cc, Hh, Ww = 2, 4, 16, 16        # num_features = 1024
    seq_len = 32                        # first hidden width
    num_classes = 10
    num_features = Cc * Hh * Ww

    x = jax.random.normal(k_x, (B, Cc, Hh, Ww), dtype=jnp.float32)
    params = init_params(k_p, num_features, seq_len, num_classes)

    logits = mlp_forward(x, params)
    logits = jax.block_until_ready(logits)

    assert logits.shape == (B, num_classes)

    # Tight check vs. a bf16-matched reference (same precision recipe as the kernel).
    ref_bf16 = mlp_reference_bf16(x, params)
    assert jnp.allclose(logits, ref_bf16, atol=5e-3, rtol=5e-3), (
        float(jnp.max(jnp.abs(logits - ref_bf16))))

    # Loose check vs. the pure-f32 PyTorch-equivalent forward (bf16 rounding error only).
    ref_f32 = mlp_reference_f32(x, params)
    assert jnp.allclose(logits, ref_f32, atol=2e-2, rtol=2e-2), (
        float(jnp.max(jnp.abs(logits - ref_f32))))

    print("KERNEL_OK")
</pallas_src>

<mosaic_0001>
module attributes {stable_mosaic.version = 11 : i64} {
  func.func @mlp_kernel(%arg0: i32, %arg1: i32, %arg2: memref<8x1024xbf16, #tpu.memory_space<vmem>>, %arg3: memref<1024x128xbf16, #tpu.memory_space<vmem>>, %arg4: memref<1x128xf32, #tpu.memory_space<vmem>>, %arg5: memref<128x128xbf16, #tpu.memory_space<vmem>>, %arg6: memref<1x128xf32, #tpu.memory_space<vmem>>, %arg7: memref<128x128xbf16, #tpu.memory_space<vmem>>, %arg8: memref<1x128xf32, #tpu.memory_space<vmem>>, %arg9: memref<8x128xf32, #tpu.memory_space<vmem>>, %arg10: memref<8x128xf32, #tpu.memory_space<vmem>>) attributes {dimension_semantics = [#tpu.dimension_semantics<parallel>, #tpu.dimension_semantics<arbitrary>], iteration_bounds = array<i64: 1, 1>, scalar_prefetch = 0 : i64, scratch_operands = 1 : i64, tpu.core_type = #tpu.core_type<tc>, window_params = [{transform_indices = @transform_0, window_bounds = array<i64: 8, 1024>}, {transform_indices = @transform_1, window_bounds = array<i64: 1024, 128>}, {pipeline_mode = #tpu.pipeline_mode<synchronous>, transform_indices = @transform_2, window_bounds = array<i64: 1, 128>}, {pipeline_mode = #tpu.pipeline_mode<synchronous>, transform_indices = @transform_3, window_bounds = array<i64: 128, 128>}, {pipeline_mode = #tpu.pipeline_mode<synchronous>, transform_indices = @transform_4, window_bounds = array<i64: 1, 128>}, {pipeline_mode = #tpu.pipeline_mode<synchronous>, transform_indices = @transform_5, window_bounds = array<i64: 128, 128>}, {pipeline_mode = #tpu.pipeline_mode<synchronous>, transform_indices = @transform_6, window_bounds = array<i64: 1, 128>}, {transform_indices = @transform_7, window_bounds = array<i64: 8, 128>}]} {
    %c0_i32 = arith.constant 0 : i32
    %0 = arith.cmpi eq, %arg1, %c0_i32 : i32
    %1 = arith.extui %0 : i1 to i32
    %c0_i32_0 = arith.constant 0 : i32
    %2 = arith.cmpi ne, %1, %c0_i32_0 : i32
    scf.if %2 {
      %cst_10 = arith.constant 0.000000e+00 : f32
      %12 = vector.broadcast %cst_10 : f32 to vector<8x128xf32>
      %c0_11 = arith.constant 0 : index
      %c0_12 = arith.constant 0 : index
      %13 = vector.load %arg10[%c0_11, %c0_12] : memref<8x128xf32, #tpu.memory_space<vmem>>, vector<8x128xf32>
      tpu.vector_store %arg10[%c0_11, %c0_12], %12 {strides = array<i32>} : memref<8x128xf32, #tpu.memory_space<vmem>>, vector<8x128xf32>,
    } else {
    }
    %c0 = arith.constant 0 : index
    %c0_1 = arith.constant 0 : index
    %3 = vector.load %arg10[%c0, %c0_1] : memref<8x128xf32, #tpu.memory_space<vmem>>, vector<8x128xf32>
    %c0_2 = arith.constant 0 : index
    %c0_3 = arith.constant 0 : index
    %4 = vector.load %arg2[%c0_2, %c0_3] : memref<8x1024xbf16, #tpu.memory_space<vmem>>, vector<8x1024xbf16>
    %c0_4 = arith.constant 0 : index
    %c0_5 = arith.constant 0 : index
    %5 = vector.load %arg3[%c0_4, %c0_5] : memref<1024x128xbf16, #tpu.memory_space<vmem>>, vector<1024x128xbf16>
    %cst = arith.constant dense<0.000000e+00> : vector<8x128xf32>
    %6 = tpu.matmul %4, %5, %cst {dimension_numbers = #tpu.dot_dimension_numbers<[1], [0], [0], [1], [0, 0, 1, 1], [], []>} : vector<8x1024xbf16>, vector<1024x128xbf16>, vector<8x128xf32> -> vector<8x128xf32>
    %7 = arith.addf %3, %6 : vector<8x128xf32>
    %c0_6 = arith.constant 0 : index
    %c0_7 = arith.constant 0 : index
    %8 = vector.load %arg10[%c0_6, %c0_7] : memref<8x128xf32, #tpu.memory_space<vmem>>, vector<8x128xf32>
    tpu.vector_store %arg10[%c0_6, %c0_7], %7 {strides = array<i32>} : memref<8x128xf32, #tpu.memory_space<vmem>>, vector<8x128xf32>,
    %c0_i32_8 = arith.constant 0 : i32
    %9 = arith.cmpi eq, %arg1, %c0_i32_8 : i32
    %10 = arith.extui %9 : i1 to i32
    %c0_i32_9 = arith.constant 0 : i32
    %11 = arith.cmpi ne, %10, %c0_i32_9 : i32
    scf.if %11 {
      %c0_10 = arith.constant 0 : index
      %c0_11 = arith.constant 0 : index
      %12 = vector.load %arg10[%c0_10, %c0_11] : memref<8x128xf32, #tpu.memory_space<vmem>>, vector<8x128xf32>
      %c0_12 = arith.constant 0 : index
      %c0_13 = arith.constant 0 : index
      %13 = vector.load %arg4[%c0_12, %c0_13] : memref<1x128xf32, #tpu.memory_space<vmem>>, vector<1x128xf32>
      %14 = vector.broadcast %13 : vector<1x128xf32> to vector<8x128xf32>
      %15 = arith.addf %12, %14 : vector<8x128xf32>
      %cst_14 = arith.constant 0.000000e+00 : f32
      %16 = vector.broadcast %cst_14 : f32 to vector<8x128xf32>
      %17 = arith.maximumf %15, %16 : vector<8x128xf32>
      %18 = arith.truncf %17 : vector<8x128xf32> to vector<8x128xbf16>
      %c0_15 = arith.constant 0 : index
      %c0_16 = arith.constant 0 : index
      %19 = vector.load %arg5[%c0_15, %c0_16] : memref<128x128xbf16, #tpu.memory_space<vmem>>, vector<128x128xbf16>
      %cst_17 = arith.constant dense<0.000000e+00> : vector<8x128xf32>
      %20 = tpu.matmul %18, %19, %cst_17 {dimension_numbers = #tpu.dot_dimension_numbers<[1], [0], [0], [1], [0, 0, 1, 1], [], []>} : vector<8x128xbf16>, vector<128x128xbf16>, vector<8x128xf32> -> vector<8x128xf32>
      %c0_18 = arith.constant 0 : index
      %c0_19 = arith.constant 0 : index
      %21 = vector.load %arg6[%c0_18, %c0_19] : memref<1x128xf32, #tpu.memory_space<vmem>>, vector<1x128xf32>
      %22 = vector.broadcast %21 : vector<1x128xf32> to vector<8x128xf32>
      %23 = arith.addf %20, %22 : vector<8x128xf32>
      %cst_20 = arith.constant 0.000000e+00 : f32
      %24 = vector.broadcast %cst_20 : f32 to vector<8x128xf32>
      %25 = arith.maximumf %23, %24 : vector<8x128xf32>
      %26 = arith.truncf %25 : vector<8x128xf32> to vector<8x128xbf16>
      %c0_21 = arith.constant 0 : index
      %c0_22 = arith.constant 0 : index
      %27 = vector.load %arg7[%c0_21, %c0_22] : memref<128x128xbf16, #tpu.memory_space<vmem>>, vector<128x128xbf16>
      %cst_23 = arith.constant dense<0.000000e+00> : vector<8x128xf32>
      %28 = tpu.matmul %26, %27, %cst_23 {dimension_numbers = #tpu.dot_dimension_numbers<[1], [0], [0], [1], [0, 0, 1, 1], [], []>} : vector<8x128xbf16>, vector<128x128xbf16>, vector<8x128xf32> -> vector<8x128xf32>
      %c0_24 = arith.constant 0 : index
      %c0_25 = arith.constant 0 : index
      %29 = vector.load %arg8[%c0_24, %c0_25] : memref<1x128xf32, #tpu.memory_space<vmem>>, vector<1x128xf32>
      %30 = vector.broadcast %29 : vector<1x128xf32> to vector<8x128xf32>
      %31 = arith.addf %28, %30 : vector<8x128xf32>
      %c0_26 = arith.constant 0 : index
      %c0_27 = arith.constant 0 : index
      %32 = vector.load %arg9[%c0_26, %c0_27] : memref<8x128xf32, #tpu.memory_space<vmem>>, vector<8x128xf32>
      tpu.vector_store %arg9[%c0_26, %c0_27], %31 {strides = array<i32>} : memref<8x128xf32, #tpu.memory_space<vmem>>, vector<8x128xf32>,
    } else {
    }
    return
  }
  func.func @transform_0(%arg0: i32, %arg1: i32) -> (i32, i32) {
    %c0_i32 = arith.constant 0 : i32
    return %arg0, %arg1 : i32, i32
  }
  func.func @transform_1(%arg0: i32, %arg1: i32) -> (i32, i32) {
    %c0_i32 = arith.constant 0 : i32
    %c0_i32_0 = arith.constant 0 : i32
    return %arg1, %c0_i32 : i32, i32
  }
  func.func @transform_2(%arg0: i32, %arg1: i32) -> (i32, i32) {
    %c0_i32 = arith.constant 0 : i32
    %c0_i32_0 = arith.constant 0 : i32
    %c0_i32_1 = arith.constant 0 : i32
    return %c0_i32, %c0_i32_0 : i32, i32
  }
  func.func @transform_3(%arg0: i32, %arg1: i32) -> (i32, i32) {
    %c0_i32 = arith.constant 0 : i32
    %c0_i32_0 = arith.constant 0 : i32
    %c0_i32_1 = arith.constant 0 : i32
    return %c0_i32, %c0_i32_0 : i32, i32
  }
  func.func @transform_4(%arg0: i32, %arg1: i32) -> (i32, i32) {
    %c0_i32 = arith.constant 0 : i32
    %c0_i32_0 = arith.constant 0 : i32
    %c0_i32_1 = arith.constant 0 : i32
    return %c0_i32, %c0_i32_0 : i32, i32
  }
  func.func @transform_5(%arg0: i32, %arg1: i32) -> (i32, i32) {
    %c0_i32 = arith.constant 0 : i32
    %c0_i32_0 = arith.constant 0 : i32
    %c0_i32_1 = arith.constant 0 : i32
    return %c0_i32, %c0_i32_0 : i32, i32
  }
  func.func @transform_6(%arg0: i32, %arg1: i32) -> (i32, i32) {
    %c0_i32 = arith.constant 0 : i32
    %c0_i32_0 = arith.constant 0 : i32
    %c0_i32_1 = arith.constant 0 : i32
    return %c0_i32, %c0_i32_0 : i32, i32
  }
  func.func @transform_7(%arg0: i32, %arg1: i32) -> (i32, i32) {
    %c0_i32 = arith.constant 0 : i32
    %c0_i32_0 = arith.constant 0 : i32
    return %arg0, %c0_i32 : i32, i32
  }
}

</mosaic_0001>

<llo_original>
// kernel: tpu_custom_call.1
$region0: #{tpu_custom_call.1}
  #allocation0 [shape = 'u32[]', space=smem, size = 0x4, offset = 0x4, fixed_abs, tag = 'smem constant byte address 0x4 - core index']
  #allocation1 [shape = 'u32[72,128]{1,0:T(1,128)}', space=vmem, size = 0x9000, scoped, tag = 'internal scratch']
  #allocation2 [shape = 'f32[8,128]{1,0:T(8,128)}', space=vmem, size = 0x1000, scoped, tag = 'scratch operand']
  %s0 = inlined_call_operand.hbm [shape: bf16[8,1024], index: 0, kind: input, shape index: {}]
  %s1 = inlined_call_operand.hbm [shape: bf16[1024,128], index: 1, kind: input, shape index: {}]
  %s2 = inlined_call_operand.vmem [shape: f32[1,128], index: 2, kind: input, shape index: {}]
  %s3 = inlined_call_operand.hbm [shape: bf16[128,128], index: 3, kind: input, shape index: {}]
  %s4 = inlined_call_operand.vmem [shape: f32[1,128], index: 4, kind: input, shape index: {}]
  %s5 = inlined_call_operand.hbm [shape: bf16[128,128], index: 5, kind: input, shape index: {}]
  %s6 = inlined_call_operand.vmem [shape: f32[1,128], index: 6, kind: input, shape index: {}]
  %s7 = inlined_call_operand.hbm [shape: f32[8,128], index: 7, kind: output, shape index: {}]
  %s8 = sld [smem:[#allocation0]]
  $region62: #{tpu_custom_call.1} parent=0
    _
  %s10 = ssub.s32 1, %s8
  %s11 = scalar_select 0, %s10, %s8
  $region1: #{tpu_custom_call.1} parent=0
    #allocation3 [shape = 'u8[16384]{0}', space=vmem, size = 0x4000, scoped, tag = 'input window, operand 0, single buffered']
    #allocation4 [shape = 's32[1]{0}', space=sflag, size = 0x4, scoped, tag = 'scoped memory for tpu_custom_call.1']
    #allocation5 [shape = 's32[1]{0}', space=sflag, size = 0x4, scoped, tag = 'scoped memory for tpu_custom_call.1']
    #allocation6 [shape = 'u8[262144]{0}', space=vmem, size = 0x40000, scoped, tag = 'input window, operand 1, single buffered']
    #allocation7 [shape = 's32[1]{0}', space=sflag, size = 0x4, scoped, tag = 'scoped memory for tpu_custom_call.1']
    #allocation8 [shape = 'u8[32768]{0}', space=vmem, size = 0x8000, scoped, tag = 'input window, operand 3, single buffered']
    #allocation9 [shape = 'u8[32768]{0}', space=vmem, size = 0x8000, scoped, tag = 'input window, operand 5, single buffered']
    #allocation10 [shape = 's32[1]{0}', space=sflag, size = 0x4, scoped, tag = 'scoped memory for tpu_custom_call.1']
    #allocation11 [shape = 'u8[4096]{0}', space=vmem, size = 0x1000, scoped, tag = 'output window, operand 0, single buffered']
    %12 = vsyncpa [#allocation4], 0
    %13 = vsyncpa [#allocation7], 0
    %14 = vsyncpa [#allocation10], 0
    %15 = vsyncpa [#allocation5], 0
    // Predicated region
    $region2: #{tpu_custom_call.1} parent=1 // pred_check
      _
    $region3: #{tpu_custom_call.1} parent=1 // pred_check_branch
      %17 = sbr.rel (0) target = $region5
    $region4: #{tpu_custom_call.1} parent=1 // pred_region
      %19 = vsyncadd [#allocation4], 0
      %s21 = sshll.u32 %s0, 4
      %s22 = int_to_ptr.hbm [resolvable:$true] %s21
      %s23 = sshll.u32 [#allocation3], 4
      %s24 = int_to_ptr.vmem [resolvable:$true] %s23
      %26 = dma.hbm_to_vmem [thread:$0]  %s22, 512, %s24, [#allocation4]
    $region5: #{tpu_custom_call.1} parent=1 // pred_fallthru
      _
    // Predicated region
    $region6: #{tpu_custom_call.1} parent=1 // pred_check
      _
    $region7: #{tpu_custom_call.1} parent=1 // pred_check_branch
      %28 = sbr.rel (0) target = $region9
    $region8: #{tpu_custom_call.1} parent=1 // pred_region
      %30 = vsyncadd [#allocation7], 0
      %s31 = sshll.u32 %s1, 4
      %s32 = int_to_ptr.hbm [resolvable:$true] %s31
      %s33 = sshll.u32 [#allocation6], 4
      %s34 = int_to_ptr.vmem [resolvable:$true] %s33
      %39 = dma.hbm_to_vmem [thread:$0]  %s32, 8192, %s34, [#allocation7], 64, 64, 4
    $region9: #{tpu_custom_call.1} parent=1 // pred_fallthru
      _
    // Predicated region
    $region10: #{tpu_custom_call.1} parent=1 // pred_check
      _
    $region11: #{tpu_custom_call.1} parent=1 // pred_check_branch
      %41 = sbr.rel (0) target = $region13
    $region12: #{tpu_custom_call.1} parent=1 // pred_region
      _
    $region13: #{tpu_custom_call.1} parent=1 // pred_fallthru
      _
    // Predicated region
    $region14: #{tpu_custom_call.1} parent=1 // pred_check
      _
    $region15: #{tpu_custom_call.1} parent=1 // pred_check_branch
      %43 = sbr.rel (0) target = $region17
    $region16: #{tpu_custom_call.1} parent=1 // pred_region
      %45 = vsyncadd [#allocation7], 0
      %s46 = sshll.u32 %s3, 4
      %s47 = int_to_ptr.hbm [resolvable:$true] %s46
      %s48 = sshll.u32 [#allocation8], 4
      %s49 = int_to_ptr.vmem [resolvable:$true] %s48
      %54 = dma.hbm_to_vmem [thread:$0]  %s47, 1024, %s49, [#allocation7], 64, 64, 4
    $region17: #{tpu_custom_call.1} parent=1 // pred_fallthru
      _
    // Predicated region
    $region18: #{tpu_custom_call.1} parent=1 // pred_check
      _
    $region19: #{tpu_custom_call.1} parent=1 // pred_check_branch
      %56 = sbr.rel (0) target = $region21
    $region20: #{tpu_custom_call.1} parent=1 // pred_region
      _
    $region21: #{tpu_custom_call.1} parent=1 // pred_fallthru
      _
    // Predicated region
    $region22: #{tpu_custom_call.1} parent=1 // pred_check
      _
    $region23: #{tpu_custom_call.1} parent=1 // pred_check_branch
      %58 = sbr.rel (0) target = $region25
    $region24: #{tpu_custom_call.1} parent=1 // pred_region
      %60 = vsyncadd [#allocation10], 0
      %s61 = sshll.u32 %s5, 4
      %s62 = int_to_ptr.hbm [resolvable:$true] %s61
      %s63 = sshll.u32 [#allocation9], 4
      %s64 = int_to_ptr.vmem [resolvable:$true] %s63
      %69 = dma.hbm_to_vmem [thread:$0]  %s62, 1024, %s64, [#allocation10], 64, 64, 4
    $region25: #{tpu_custom_call.1} parent=1 // pred_fallthru
      _
    // Predicated region
    $region26: #{tpu_custom_call.1} parent=1 // pred_check
      _
    $region27: #{tpu_custom_call.1} parent=1 // pred_check_branch
      %71 = sbr.rel (0) target = $region29
    $region28: #{tpu_custom_call.1} parent=1 // pred_region
      _
    $region29: #{tpu_custom_call.1} parent=1 // pred_fallthru
      _
    // Predicated region
    $region30: #{tpu_custom_call.1} parent=1 // pred_check
      _
    $region31: #{tpu_custom_call.1} parent=1 // pred_check_branch
      %73 = sbr.rel (0) target = $region33
    $region32: #{tpu_custom_call.1} parent=1 // pred_region
      %75 = dma.done [#allocation4], 512
    $region33: #{tpu_custom_call.1} parent=1 // pred_fallthru
      _
    // Predicated region
    $region34: #{tpu_custom_call.1} parent=1 // pred_check
      _
    $region35: #{tpu_custom_call.1} parent=1 // pred_check_branch
      %77 = sbr.rel (0) target = $region37
    $region36: #{tpu_custom_call.1} parent=1 // pred_region
      %79 = dma.done [#allocation7], 8192
    $region37: #{tpu_custom_call.1} parent=1 // pred_fallthru
      _
    // Predicated region
    $region38: #{tpu_custom_call.1} parent=1 // pred_check
      _
    $region39: #{tpu_custom_call.1} parent=1 // pred_check_branch
      %81 = sbr.rel (0) target = $region41
    $region40: #{tpu_custom_call.1} parent=1 // pred_region
      %83 = dma.done [#allocation7], 1024
    $region41: #{tpu_custom_call.1} parent=1 // pred_fallthru
      _
    // Predicated region
    $region42: #{tpu_custom_call.1} parent=1 // pred_check
      _
    $region43: #{tpu_custom_call.1} parent=1 // pred_check_branch
      %85 = sbr.rel (0) target = $region45
    $region44: #{tpu_custom_call.1} parent=1 // pred_region
      %87 = dma.done [#allocation10], 1024
    $region45: #{tpu_custom_call.1} parent=1 // pred_fallthru
      _
    %p88 = scmp.eq.s32.totalorder 0, 0
    // Predicated region
    $region46: #{tpu_custom_call.1} parent=1 // pred_check
      %p89 = pneg %p88
    $region47: #{tpu_custom_call.1} parent=1 // pred_check_branch
      %91 = sbr.rel (%p89) target = $region49
    $region48: #{tpu_custom_call.1} parent=1 // pred_region
      %92 = vst [vmem:[#allocation2] sm:$0xff] 0.0
    $region49: #{tpu_custom_call.1} parent=1 // pred_fallthru
      _
    %v93 = vld [vmem:[#allocation2] sm:$0xff]
    %v94 = vld [vmem:[#allocation3] sm:$0xff]
    %v95 = vld [vmem:[#allocation3 + $0x8] sm:$0xff]
    %v96 = vld [vmem:[#allocation3 + $0x10] sm:$0xff]
    %v97 = vld [vmem:[#allocation3 + $0x18] sm:$0xff]
    %v98 = vld [vmem:[#allocation6] sm:$0xf]
    %v99 = vld [vmem:[#allocation6 + $0x4] sm:$0xf]
    %v100 = vld [vmem:[#allocation6 + $0x8] sm:$0xf]
    %v101 = vld [vmem:[#allocation6 + $0xc] sm:$0xf]
    %v102 = vld [vmem:[#allocation6 + $0x10] sm:$0xf]
    %v103 = vld [vmem:[#allocation6 + $0x14] sm:$0xf]
    %v104 = vld [vmem:[#allocation6 + $0x18] sm:$0xf]
    %v105 = vld [vmem:[#allocation6 + $0x1c] sm:$0xf]
    %v106 = vld [vmem:[#allocation6 + $0x20] sm:$0xf]
    %v107 = vld [vmem:[#allocation6 + $0x24] sm:$0xf]
    %v108 = vld [vmem:[#allocation6 + $0x28] sm:$0xf]
    %v109 = vld [vmem:[#allocation6 + $0x2c] sm:$0xf]
    %v110 = vld [vmem:[#allocation6 + $0x30] sm:$0xf]
    %v111 = vld [vmem:[#allocation6 + $0x34] sm:$0xf]
    %v112 = vld [vmem:[#allocation6 + $0x38] sm:$0xf]
    %v113 = vld [vmem:[#allocation6 + $0x3c] sm:$0xf]
    %v114 = vld [vmem:[#allocation6 + $0x40] sm:$0xf]
    %v115 = vld [vmem:[#allocation6 + $0x44] sm:$0xf]
    %v116 = vld [vmem:[#allocation6 + $0x48] sm:$0xf]
    %v117 = vld [vmem:[#allocation6 + $0x4c] sm:$0xf]
    %v118 = vld [vmem:[#allocation6 + $0x50] sm:$0xf]
    %v119 = vld [vmem:[#allocation6 + $0x54] sm:$0xf]
    %v120 = vld [vmem:[#allocation6 + $0x58] sm:$0xf]
    %v121 = vld [vmem:[#allocation6 + $0x5c] sm:$0xf]
    %v122 = vld [vmem:[#allocation6 + $0x60] sm:$0xf]
    %v123 = vld [vmem:[#allocation6 + $0x64] sm:$0xf]
    %v124 = vld [vmem:[#allocation6 + $0x68] sm:$0xf]
    %v125 = vld [vmem:[#allocation6 + $0x6c] sm:$0xf]
    %v126 = vld [vmem:[#allocation6 + $0x70] sm:$0xf]
    %v127 = vld [vmem:[#allocation6 + $0x74] sm:$0xf]
    %v128 = vld [vmem:[#allocation6 + $0x78] sm:$0xf]
    %v129 = vld [vmem:[#allocation6 + $0x7c] sm:$0xf]
    %v130 = vld [vmem:[#allocation6 + $0x80] sm:$0xf]
    %v131 = vld [vmem:[#allocation6 + $0x84] sm:$0xf]
    %v132 = vld [vmem:[#allocation6 + $0x88] sm:$0xf]
    %v133 = vld [vmem:[#allocation6 + $0x8c] sm:$0xf]
    %v134 = vld [vmem:[#allocation6 + $0x90] sm:$0xf]
    %v135 = vld [vmem:[#allocation6 + $0x94] sm:$0xf]
    %v136 = vld [vmem:[#allocation6 + $0x98] sm:$0xf]
    %v137 = vld [vmem:[#allocation6 + $0x9c] sm:$0xf]
    %v138 = vld [vmem:[#allocation6 + $0xa0] sm:$0xf]
    %v139 = vld [vmem:[#allocation6 + $0xa4] sm:$0xf]
    %v140 = vld [vmem:[#allocation6 + $0xa8] sm:$0xf]
    %v141 = vld [vmem:[#allocation6 + $0xac] sm:$0xf]
    %v142 = vld [vmem:[#allocation6 + $0xb0] sm:$0xf]
    %v143 = vld [vmem:[#allocation6 + $0xb4] sm:$0xf]
    %v144 = vld [vmem:[#allocation6 + $0xb8] sm:$0xf]
    %v145 = vld [vmem:[#allocation6 + $0xbc] sm:$0xf]
    %v146 = vld [vmem:[#allocation6 + $0xc0] sm:$0xf]
    %v147 = vld [vmem:[#allocation6 + $0xc4] sm:$0xf]
    %v148 = vld [vmem:[#allocation6 + $0xc8] sm:$0xf]
    %v149 = vld [vmem:[#allocation6 + $0xcc] sm:$0xf]
    %v150 = vld [vmem:[#allocation6 + $0xd0] sm:$0xf]
    %v151 = vld [vmem:[#allocation6 + $0xd4] sm:$0xf]
    %v152 = vld [vmem:[#allocation6 + $0xd8] sm:$0xf]
    %v153 = vld [vmem:[#allocation6 + $0xdc] sm:$0xf]
    %v154 = vld [vmem:[#allocation6 + $0xe0] sm:$0xf]
    %v155 = vld [vmem:[#allocation6 + $0xe4] sm:$0xf]
    %v156 = vld [vmem:[#allocation6 + $0xe8] sm:$0xf]
    %v157 = vld [vmem:[#allocation6 + $0xec] sm:$0xf]
    %v158 = vld [vmem:[#allocation6 + $0xf0] sm:$0xf]
    %v159 = vld [vmem:[#allocation6 + $0xf4] sm:$0xf]
    %v160 = vld [vmem:[#allocation6 + $0xf8] sm:$0xf]
    %v161 = vld [vmem:[#allocation6 + $0xfc] sm:$0xf]
    %v162 = vld [vmem:[#allocation6 + $0x100] sm:$0xf]
    %v163 = vld [vmem:[#allocation6 + $0x104] sm:$0xf]
    %v164 = vld [vmem:[#allocation6 + $0x108] sm:$0xf]
    %v165 = vld [vmem:[#allocation6 + $0x10c] sm:$0xf]
    %v166 = vld [vmem:[#allocation6 + $0x110] sm:$0xf]
    %v167 = vld [vmem:[#allocation6 + $0x114] sm:$0xf]
    %v168 = vld [vmem:[#allocation6 + $0x118] sm:$0xf]
    %v169 = vld [vmem:[#allocation6 + $0x11c] sm:$0xf]
    %v170 = vld [vmem:[#allocation6 + $0x120] sm:$0xf]
    %v171 = vld [vmem:[#allocation6 + $0x124] sm:$0xf]
    %v172 = vld [vmem:[#allocation6 + $0x128] sm:$0xf]
    %v173 = vld [vmem:[#allocation6 + $0x12c] sm:$0xf]
    %v174 = vld [vmem:[#allocation6 + $0x130] sm:$0xf]
    %v175 = vld [vmem:[#allocation6 + $0x134] sm:$0xf]
    %v176 = vld [vmem:[#allocation6 + $0x138] sm:$0xf]
    %v177 = vld [vmem:[#allocation6 + $0x13c] sm:$0xf]
    %v178 = vld [vmem:[#allocation6 + $0x140] sm:$0xf]
    %v179 = vld [vmem:[#allocation6 + $0x144] sm:$0xf]
    %v180 = vld [vmem:[#allocation6 + $0x148] sm:$0xf]
    %v181 = vld [vmem:[#allocation6 + $0x14c] sm:$0xf]
    %v182 = vld [vmem:[#allocation6 + $0x150] sm:$0xf]
    %v183 = vld [vmem:[#allocation6 + $0x154] sm:$0xf]
    %v184 = vld [vmem:[#allocation6 + $0x158] sm:$0xf]
    %v185 = vld [vmem:[#allocation6 + $0x15c] sm:$0xf]
    %v186 = vld [vmem:[#allocation6 + $0x160] sm:$0xf]
    %v187 = vld [vmem:[#allocation6 + $0x164] sm:$0xf]
    %v188 = vld [vmem:[#allocation6 + $0x168] sm:$0xf]
    %v189 = vld [vmem:[#allocation6 + $0x16c] sm:$0xf]
    %v190 = vld [vmem:[#allocation6 + $0x170] sm:$0xf]
    %v191 = vld [vmem:[#allocation6 + $0x174] sm:$0xf]
    %v192 = vld [vmem:[#allocation6 + $0x178] sm:$0xf]
    %v193 = vld [vmem:[#allocation6 + $0x17c] sm:$0xf]
    %v194 = vld [vmem:[#allocation6 + $0x180] sm:$0xf]
    %v195 = vld [vmem:[#allocation6 + $0x184] sm:$0xf]
    %v196 = vld [vmem:[#allocation6 + $0x188] sm:$0xf]
    %v197 = vld [vmem:[#allocation6 + $0x18c] sm:$0xf]
    %v198 = vld [vmem:[#allocation6 + $0x190] sm:$0xf]
    %v199 = vld [vmem:[#allocation6 + $0x194] sm:$0xf]
    %v200 = vld [vmem:[#allocation6 + $0x198] sm:$0xf]
    %v201 = vld [vmem:[#allocation6 + $0x19c] sm:$0xf]
    %v202 = vld [vmem:[#allocation6 + $0x1a0] sm:$0xf]
    %v203 = vld [vmem:[#allocation6 + $0x1a4] sm:$0xf]
    %v204 = vld [vmem:[#allocation6 + $0x1a8] sm:$0xf]
    %v205 = vld [vmem:[#allocation6 + $0x1ac] sm:$0xf]
    %v206 = vld [vmem:[#allocation6 + $0x1b0] sm:$0xf]
    %v207 = vld [vmem:[#allocation6 + $0x1b4] sm:$0xf]
    %v208 = vld [vmem:[#allocation6 + $0x1b8] sm:$0xf]
    %v209 = vld [vmem:[#allocation6 + $0x1bc] sm:$0xf]
    %v210 = vld [vmem:[#allocation6 + $0x1c0] sm:$0xf]
    %v211 = vld [vmem:[#allocation6 + $0x1c4] sm:$0xf]
    %v212 = vld [vmem:[#allocation6 + $0x1c8] sm:$0xf]
    %v213 = vld [vmem:[#allocation6 + $0x1cc] sm:$0xf]
    %v214 = vld [vmem:[#allocation6 + $0x1d0] sm:$0xf]
    %v215 = vld [vmem:[#allocation6 + $0x1d4] sm:$0xf]
    %v216 = vld [vmem:[#allocation6 + $0x1d8] sm:$0xf]
    %v217 = vld [vmem:[#allocation6 + $0x1dc] sm:$0xf]
    %v218 = vld [vmem:[#allocation6 + $0x1e0] sm:$0xf]
    %v219 = vld [vmem:[#allocation6 + $0x1e4] sm:$0xf]
    %v220 = vld [vmem:[#allocation6 + $0x1e8] sm:$0xf]
    %v221 = vld [vmem:[#allocation6 + $0x1ec] sm:$0xf]
    %v222 = vld [vmem:[#allocation6 + $0x1f0] sm:$0xf]
    %v223 = vld [vmem:[#allocation6 + $0x1f4] sm:$0xf]
    %v224 = vld [vmem:[#allocation6 + $0x1f8] sm:$0xf]
    %v225 = vld [vmem:[#allocation6 + $0x1fc] sm:$0xf]
    %v230 = vunpack.c.l.b16 %v94
    %v231 = vunpack.c.h.b16 %v94
    %v232 = vunpack.c.l.b16 %v95
    %v233 = vunpack.c.h.b16 %v95
    %v234 = vunpack.c.l.b16 %v96
    %v235 = vunpack.c.h.b16 %v96
    %v236 = vunpack.c.l.b16 %v97
    %v237 = vunpack.c.h.b16 %v97
    %v238 = vpack.c.b16 %v230, %v230
    %v239 = vpack.c.b16 %v231, %v231
    %v240 = vpack.c.b16 %v232, %v232
    %v241 = vpack.c.b16 %v233, %v233
    %v242 = vpack.c.b16 %v234, %v234
    %v243 = vpack.c.b16 %v235, %v235
    %v244 = vpack.c.b16 %v236, %v236
    %v245 = vpack.c.b16 %v237, %v237
    %v382 = vunpack.c.l.b16 %v98
    %v383 = vunpack.c.l.b16 %v99
    %v384 = vunpack.c.l.b16 %v100
    %v385 = vunpack.c.l.b16 %v101
    %v386 = vunpack.c.l.b16 %v102
    %v387 = vunpack.c.l.b16 %v103
    %v388 = vunpack.c.l.b16 %v104
    %v389 = vunpack.c.l.b16 %v105
    %v390 = vunpack.c.l.b16 %v106
    %v391 = vunpack.c.l.b16 %v107
    %v392 = vunpack.c.l.b16 %v108
    %v393 = vunpack.c.l.b16 %v109
    %v394 = vunpack.c.l.b16 %v110
    %v395 = vunpack.c.l.b16 %v111
    %v396 = vunpack.c.l.b16 %v112
    %v397 = vunpack.c.l.b16 %v113
    %v398 = vunpack.c.l.b16 %v114
    %v399 = vunpack.c.l.b16 %v115
    %v400 = vunpack.c.l.b16 %v116
    %v401 = vunpack.c.l.b16 %v117
    %v402 = vunpack.c.l.b16 %v118
    %v403 = vunpack.c.l.b16 %v119
    %v404 = vunpack.c.l.b16 %v120
    %v405 = vunpack.c.l.b16 %v121
    %v406 = vunpack.c.l.b16 %v122
    %v407 = vunpack.c.l.b16 %v123
    %v408 = vunpack.c.l.b16 %v124
    %v409 = vunpack.c.l.b16 %v125
    %v410 = vunpack.c.l.b16 %v126
    %v411 = vunpack.c.l.b16 %v127
    %v412 = vunpack.c.l.b16 %v128
    %v413 = vunpack.c.l.b16 %v129
    %v414 = vunpack.c.l.b16 %v130
    %v415 = vunpack.c.l.b16 %v131
    %v416 = vunpack.c.l.b16 %v132
    %v417 = vunpack.c.l.b16 %v133
    %v418 = vunpack.c.l.b16 %v134
    %v419 = vunpack.c.l.b16 %v135
    %v420 = vunpack.c.l.b16 %v136
    %v421 = vunpack.c.l.b16 %v137
    %v422 = vunpack.c.l.b16 %v138
    %v423 = vunpack.c.l.b16 %v139
    %v424 = vunpack.c.l.b16 %v140
    %v425 = vunpack.c.l.b16 %v141
    %v426 = vunpack.c.l.b16 %v142
    %v427 = vunpack.c.l.b16 %v143
    %v428 = vunpack.c.l.b16 %v144
    %v429 = vunpack.c.l.b16 %v145
    %v430 = vunpack.c.l.b16 %v146
    %v431 = vunpack.c.l.b16 %v147
    %v432 = vunpack.c.l.b16 %v148
    %v433 = vunpack.c.l.b16 %v149
    %v434 = vunpack.c.l.b16 %v150
    %v435 = vunpack.c.l.b16 %v151
    %v436 = vunpack.c.l.b16 %v152
    %v437 = vunpack.c.l.b16 %v153
    %v438 = vunpack.c.l.b16 %v154
    %v439 = vunpack.c.l.b16 %v155
    %v440 = vunpack.c.l.b16 %v156
    %v441 = vunpack.c.l.b16 %v157
    %v442 = vunpack.c.l.b16 %v158
    %v443 = vunpack.c.l.b16 %v159
    %v444 = vunpack.c.l.b16 %v160
    %v445 = vunpack.c.l.b16 %v161
    %v446 = vunpack.c.l.b16 %v162
    %v447 = vunpack.c.l.b16 %v163
    %v448 = vunpack.c.l.b16 %v164
    %v449 = vunpack.c.l.b16 %v165
    %v450 = vunpack.c.l.b16 %v166
    %v451 = vunpack.c.l.b16 %v167
    %v452 = vunpack.c.l.b16 %v168
    %v453 = vunpack.c.l.b16 %v169
    %v454 = vunpack.c.l.b16 %v170
    %v455 = vunpack.c.l.b16 %v171
    %v456 = vunpack.c.l.b16 %v172
    %v457 = vunpack.c.l.b16 %v173
    %v458 = vunpack.c.l.b16 %v174
    %v459 = vunpack.c.l.b16 %v175
    %v460 = vunpack.c.l.b16 %v176
    %v461 = vunpack.c.l.b16 %v177
    %v462 = vunpack.c.l.b16 %v178
    %v463 = vunpack.c.l.b16 %v179
    %v464 = vunpack.c.l.b16 %v180
    %v465 = vunpack.c.l.b16 %v181
    %v466 = vunpack.c.l.b16 %v182
    %v467 = vunpack.c.l.b16 %v183
    %v468 = vunpack.c.l.b16 %v184
    %v469 = vunpack.c.l.b16 %v185
    %v470 = vunpack.c.l.b16 %v186
    %v471 = vunpack.c.l.b16 %v187
    %v472 = vunpack.c.l.b16 %v188
    %v473 = vunpack.c.l.b16 %v189
    %v474 = vunpack.c.l.b16 %v190
    %v475 = vunpack.c.l.b16 %v191
    %v476 = vunpack.c.l.b16 %v192
    %v477 = vunpack.c.l.b16 %v193
    %v478 = vunpack.c.l.b16 %v194
    %v479 = vunpack.c.l.b16 %v195
    %v480 = vunpack.c.l.b16 %v196
    %v481 = vunpack.c.l.b16 %v197
    %v482 = vunpack.c.l.b16 %v198
    %v483 = vunpack.c.l.b16 %v199
    %v484 = vunpack.c.l.b16 %v200
    %v485 = vunpack.c.l.b16 %v201
    %v486 = vunpack.c.l.b16 %v202
    %v487 = vunpack.c.l.b16 %v203
    %v488 = vunpack.c.l.b16 %v204
    %v489 = vunpack.c.l.b16 %v205
    %v490 = vunpack.c.l.b16 %v206
    %v491 = vunpack.c.l.b16 %v207
    %v492 = vunpack.c.l.b16 %v208
    %v493 = vunpack.c.l.b16 %v209
    %v494 = vunpack.c.l.b16 %v210
    %v495 = vunpack.c.l.b16 %v211
    %v496 = vunpack.c.l.b16 %v212
    %v497 = vunpack.c.l.b16 %v213
    %v498 = vunpack.c.l.b16 %v214
    %v499 = vunpack.c.l.b16 %v215
    %v500 = vunpack.c.l.b16 %v216
    %v501 = vunpack.c.l.b16 %v217
    %v502 = vunpack.c.l.b16 %v218
    %v503 = vunpack.c.l.b16 %v219
    %v504 = vunpack.c.l.b16 %v220
    %v505 = vunpack.c.l.b16 %v221
    %v506 = vunpack.c.l.b16 %v222
    %v507 = vunpack.c.l.b16 %v223
    %v508 = vunpack.c.l.b16 %v224
    %v509 = vunpack.c.l.b16 %v225
    %v510 = vpack.c.b16 %v383, %v382
    %v511 = vpack.c.b16 %v385, %v384
    %v512 = vpack.c.b16 %v387, %v386
    %v513 = vpack.c.b16 %v389, %v388
    %v514 = vpack.c.b16 %v391, %v390
    %v515 = vpack.c.b16 %v393, %v392
    %v516 = vpack.c.b16 %v395, %v394
    %v517 = vpack.c.b16 %v397, %v396
    %v518 = vpack.c.b16 %v399, %v398
    %v519 = vpack.c.b16 %v401, %v400
    %v520 = vpack.c.b16 %v403, %v402
    %v521 = vpack.c.b16 %v405, %v404
    %v522 = vpack.c.b16 %v407, %v406
    %v523 = vpack.c.b16 %v409, %v408
    %v524 = vpack.c.b16 %v411, %v410
    %v525 = vpack.c.b16 %v413, %v412
    %v526 = vpack.c.b16 %v415, %v414
    %v527 = vpack.c.b16 %v417, %v416
    %v528 = vpack.c.b16 %v419, %v418
    %v529 = vpack.c.b16 %v421, %v420
    %v530 = vpack.c.b16 %v423, %v422
    %v531 = vpack.c.b16 %v425, %v424
    %v532 = vpack.c.b16 %v427, %v426
    %v533 = vpack.c.b16 %v429, %v428
    %v534 = vpack.c.b16 %v431, %v430
    %v535 = vpack.c.b16 %v433, %v432
    %v536 = vpack.c.b16 %v435, %v434
    %v537 = vpack.c.b16 %v437, %v436
    %v538 = vpack.c.b16 %v439, %v438
    %v539 = vpack.c.b16 %v441, %v440
    %v540 = vpack.c.b16 %v443, %v442
    %v541 = vpack.c.b16 %v445, %v444
    %v542 = vpack.c.b16 %v447, %v446
    %v543 = vpack.c.b16 %v449, %v448
    %v544 = vpack.c.b16 %v451, %v450
    %v545 = vpack.c.b16 %v453, %v452
    %v546 = vpack.c.b16 %v455, %v454
    %v547 = vpack.c.b16 %v457, %v456
    %v548 = vpack.c.b16 %v459, %v458
    %v549 = vpack.c.b16 %v461, %v460
    %v550 = vpack.c.b16 %v463, %v462
    %v551 = vpack.c.b16 %v465, %v464
    %v552 = vpack.c.b16 %v467, %v466
    %v553 = vpack.c.b16 %v469, %v468
    %v554 = vpack.c.b16 %v471, %v470
    %v555 = vpack.c.b16 %v473, %v472
    %v556 = vpack.c.b16 %v475, %v474
    %v557 = vpack.c.b16 %v477, %v476
    %v558 = vpack.c.b16 %v479, %v478
    %v559 = vpack.c.b16 %v481, %v480
    %v560 = vpack.c.b16 %v483, %v482
    %v561 = vpack.c.b16 %v485, %v484
    %v562 = vpack.c.b16 %v487, %v486
    %v563 = vpack.c.b16 %v489, %v488
    %v564 = vpack.c.b16 %v491, %v490
    %v565 = vpack.c.b16 %v493, %v492
    %v566 = vpack.c.b16 %v495, %v494
    %v567 = vpack.c.b16 %v497, %v496
    %v568 = vpack.c.b16 %v499, %v498
    %v569 = vpack.c.b16 %v501, %v500
    %v570 = vpack.c.b16 %v503, %v502
    %v571 = vpack.c.b16 %v505, %v504
    %v572 = vpack.c.b16 %v507, %v506
    %v573 = vpack.c.b16 %v509, %v508
    %638 = vmatpush.bf16.msra.mxu0 %v517
    %639 = vmatpush.bf16.msra.mxu0 %v516
    %640 = vmatpush.bf16.msra.mxu0 %v515
    %641 = vmatpush.bf16.msra.mxu0 %v514
    %642 = vmatpush.bf16.msra.mxu0 %v513
    %643 = vmatpush.bf16.msra.mxu0 %v512
    %644 = vmatpush.bf16.msra.mxu0 %v511
    %645 = vmatpush.bf16.msra.mxu0 %v510
    %646 = vmatmul.bf16.gmra.mxu0 %v238
    %v647 = vpop.f32.mrf.mxu0
    %v648 = vadd.f32 0.0, %v647
    %v649 = vpop.f32.mrf.mxu0
    %650 = vdwg.mxu0
    %651 = vmatpush.bf16.msra.mxu0 %v525
    %652 = vmatpush.bf16.msra.mxu0 %v524
    %653 = vmatpush.bf16.msra.mxu0 %v523
    %654 = vmatpush.bf16.msra.mxu0 %v522
    %655 = vmatpush.bf16.msra.mxu0 %v521
    %656 = vmatpush.bf16.msra.mxu0 %v520
    %657 = vmatpush.bf16.msra.mxu0 %v519
    %658 = vmatpush.bf16.msra.mxu0 %v518
    %659 = vmatmul.bf16.gmra.mxu0 %v239
    %v660 = vpop.f32.mrf.mxu0
    %v661 = vadd.f32 %v648, %v660
    %v662 = vpop.f32.mrf.mxu0
    %663 = vdwg.mxu0
    %664 = vmatpush.bf16.msra.mxu0 %v533
    %665 = vmatpush.bf16.msra.mxu0 %v532
    %666 = vmatpush.bf16.msra.mxu0 %v531
    %667 = vmatpush.bf16.msra.mxu0 %v530
    %668 = vmatpush.bf16.msra.mxu0 %v529
    %669 = vmatpush.bf16.msra.mxu0 %v528
    %670 = vmatpush.bf16.msra.mxu0 %v527
    %671 = vmatpush.bf16.msra.mxu0 %v526
    %672 = vmatmul.bf16.gmra.mxu0 %v240
    %v673 = vpop.f32.mrf.mxu0
    %v674 = vadd.f32 %v661, %v673
    %v675 = vpop.f32.mrf.mxu0
    %676 = vdwg.mxu0
    %677 = vmatpush.bf16.msra.mxu0 %v541
    %678 = vmatpush.bf16.msra.mxu0 %v540
    %679 = vmatpush.bf16.msra.mxu0 %v539
    %680 = vmatpush.bf16.msra.mxu0 %v538
    %681 = vmatpush.bf16.msra.mxu0 %v537
    %682 = vmatpush.bf16.msra.mxu0 %v536
    %683 = vmatpush.bf16.msra.mxu0 %v535
    %684 = vmatpush.bf16.msra.mxu0 %v534
    %685 = vmatmul.bf16.gmra.mxu0 %v241
    %v686 = vpop.f32.mrf.mxu0
    %v687 = vadd.f32 %v674, %v686
    %v688 = vpop.f32.mrf.mxu0
    %689 = vdwg.mxu0
    %690 = vmatpush.bf16.msra.mxu0 %v549
    %691 = vmatpush.bf16.msra.mxu0 %v548
    %692 = vmatpush.bf16.msra.mxu0 %v547
    %693 = vmatpush.bf16.msra.mxu0 %v546
    %694 = vmatpush.bf16.msra.mxu0 %v545
    %695 = vmatpush.bf16.msra.mxu0 %v544
    %696 = vmatpush.bf16.msra.mxu0 %v543
    %697 = vmatpush.bf16.msra.mxu0 %v542
    %698 = vmatmul.bf16.gmra.mxu0 %v242
    %v699 = vpop.f32.mrf.mxu0
    %v700 = vadd.f32 %v687, %v699
    %v701 = vpop.f32.mrf.mxu0
    %702 = vdwg.mxu0
    %703 = vmatpush.bf16.msra.mxu0 %v557
    %704 = vmatpush.bf16.msra.mxu0 %v556
    %705 = vmatpush.bf16.msra.mxu0 %v555
    %706 = vmatpush.bf16.msra.mxu0 %v554
    %707 = vmatpush.bf16.msra.mxu0 %v553
    %708 = vmatpush.bf16.msra.mxu0 %v552
    %709 = vmatpush.bf16.msra.mxu0 %v551
    %710 = vmatpush.bf16.msra.mxu0 %v550
    %711 = vmatmul.bf16.gmra.mxu0 %v243
    %v712 = vpop.f32.mrf.mxu0
    %v713 = vadd.f32 %v700, %v712
    %v714 = vpop.f32.mrf.mxu0
    %715 = vdwg.mxu0
    %716 = vmatpush.bf16.msra.mxu0 %v565
    %717 = vmatpush.bf16.msra.mxu0 %v564
    %718 = vmatpush.bf16.msra.mxu0 %v563
    %719 = vmatpush.bf16.msra.mxu0 %v562
    %720 = vmatpush.bf16.msra.mxu0 %v561
    %721 = vmatpush.bf16.msra.mxu0 %v560
    %722 = vmatpush.bf16.msra.mxu0 %v559
    %723 = vmatpush.bf16.msra.mxu0 %v558
    %724 = vmatmul.bf16.gmra.mxu0 %v244
    %v725 = vpop.f32.mrf.mxu0
    %v726 = vadd.f32 %v713, %v725
    %v727 = vpop.f32.mrf.mxu0
    %728 = vdwg.mxu0
    %729 = vmatpush.bf16.msra.mxu0 %v573
    %730 = vmatpush.bf16.msra.mxu0 %v572
    %731 = vmatpush.bf16.msra.mxu0 %v571
    %732 = vmatpush.bf16.msra.mxu0 %v570
    %733 = vmatpush.bf16.msra.mxu0 %v569
    %734 = vmatpush.bf16.msra.mxu0 %v568
    %735 = vmatpush.bf16.msra.mxu0 %v567
    %736 = vmatpush.bf16.msra.mxu0 %v566
    %737 = vmatmul.bf16.gmra.mxu0 %v245
    %v738 = vpop.f32.mrf.mxu0
    %v739 = vadd.f32 %v726, %v738
    %v740 = vpop.f32.mrf.mxu0
    %741 = vdwg.mxu0
    %v742 = vadd.f32 %v93, %v739
    %743 = vst [vmem:[#allocation2] sm:$0xff] %v742
    // Predicated region
    $region50: #{tpu_custom_call.1} parent=1 // pred_check
      %p744 = pneg %p88
    $region51: #{tpu_custom_call.1} parent=1 // pred_check_branch
      %746 = sbr.rel (%p744) target = $region53
    $region52: #{tpu_custom_call.1} parent=1 // pred_region
      %v747 = vld [vmem:[#allocation2] sm:$0xff]
      %v748 = vld [vmem:[%s2] sm:$0x1]
      %v750 = vperm.slane %v748, 0
      %v752 = vadd.f32 %v747, %v750
      %v753 = vmax.f32 %v752, 0.0
      %v754 = vpack.c.bf16 %v753, %v753
      %v755 = vld [vmem:[#allocation8] sm:$0xf]
      %v756 = vld [vmem:[#allocation8 + $0x4] sm:$0xf]
      %v757 = vld [vmem:[#allocation8 + $0x8] sm:$0xf]
      %v758 = vld [vmem:[#allocation8 + $0xc] sm:$0xf]
      %v759 = vld [vmem:[#allocation8 + $0x10] sm:$0xf]
      %v760 = vld [vmem:[#allocation8 + $0x14] sm:$0xf]
      %v761 = vld [vmem:[#allocation8 + $0x18] sm:$0xf]
      %v762 = vld [vmem:[#allocation8 + $0x1c] sm:$0xf]
      %v763 = vld [vmem:[#allocation8 + $0x20] sm:$0xf]
      %v764 = vld [vmem:[#allocation8 + $0x24] sm:$0xf]
      %v765 = vld [vmem:[#allocation8 + $0x28] sm:$0xf]
      %v766 = vld [vmem:[#allocation8 + $0x2c] sm:$0xf]
      %v767 = vld [vmem:[#allocation8 + $0x30] sm:$0xf]
      %v768 = vld [vmem:[#allocation8 + $0x34] sm:$0xf]
      %v769 = vld [vmem:[#allocation8 + $0x38] sm:$0xf]
      %v770 = vld [vmem:[#allocation8 + $0x3c] sm:$0xf]
      %v771 = vld [vmem:[%s4] sm:$0x1]
      %v773 = vperm.slane %v771, 0
      %v791 = vunpack.c.l.b16 %v755
      %v792 = vunpack.c.l.b16 %v756
      %v793 = vunpack.c.l.b16 %v757
      %v794 = vunpack.c.l.b16 %v758
      %v795 = vunpack.c.l.b16 %v759
      %v796 = vunpack.c.l.b16 %v760
      %v797 = vunpack.c.l.b16 %v761
      %v798 = vunpack.c.l.b16 %v762
      %v799 = vunpack.c.l.b16 %v763
      %v800 = vunpack.c.l.b16 %v764
      %v801 = vunpack.c.l.b16 %v765
      %v802 = vunpack.c.l.b16 %v766
      %v803 = vunpack.c.l.b16 %v767
      %v804 = vunpack.c.l.b16 %v768
      %v805 = vunpack.c.l.b16 %v769
      %v806 = vunpack.c.l.b16 %v770
      %v807 = vpack.c.b16 %v792, %v791
      %v808 = vpack.c.b16 %v794, %v793
      %v809 = vpack.c.b16 %v796, %v795
      %v810 = vpack.c.b16 %v798, %v797
      %v811 = vpack.c.b16 %v800, %v799
      %v812 = vpack.c.b16 %v802, %v801
      %v813 = vpack.c.b16 %v804, %v803
      %v814 = vpack.c.b16 %v806, %v805
      %823 = vmatpush.bf16.msra.mxu0 %v814
      %824 = vmatpush.bf16.msra.mxu0 %v813
      %825 = vmatpush.bf16.msra.mxu0 %v812
      %826 = vmatpush.bf16.msra.mxu0 %v811
      %827 = vmatpush.bf16.msra.mxu0 %v810
      %828 = vmatpush.bf16.msra.mxu0 %v809
      %829 = vmatpush.bf16.msra.mxu0 %v808
      %830 = vmatpush.bf16.msra.mxu0 %v807
      %831 = vmatmul.bf16.gmra.mxu0 %v754
      %v832 = vpop.f32.mrf.mxu0
      %v833 = vadd.f32 %v773, %v832
      %v834 = vpop.f32.mrf.mxu0
      %835 = vdwg.mxu0
      %v836 = vmax.f32 %v833, 0.0
      %v837 = vpack.c.bf16 %v836, %v836
      %v838 = vld [vmem:[#allocation9] sm:$0xf]
      %v839 = vld [vmem:[#allocation9 + $0x4] sm:$0xf]
      %v840 = vld [vmem:[#allocation9 + $0x8] sm:$0xf]
      %v841 = vld [vmem:[#allocation9 + $0xc] sm:$0xf]
      %v842 = vld [vmem:[#allocation9 + $0x10] sm:$0xf]
      %v843 = vld [vmem:[#allocation9 + $0x14] sm:$0xf]
      %v844 = vld [vmem:[#allocation9 + $0x18] sm:$0xf]
      %v845 = vld [vmem:[#allocation9 + $0x1c] sm:$0xf]
      %v846 = vld [vmem:[#allocation9 + $0x20] sm:$0xf]
      %v847 = vld [vmem:[#allocation9 + $0x24] sm:$0xf]
      %v848 = vld [vmem:[#allocation9 + $0x28] sm:$0xf]
      %v849 = vld [vmem:[#allocation9 + $0x2c] sm:$0xf]
      %v850 = vld [vmem:[#allocation9 + $0x30] sm:$0xf]
      %v851 = vld [vmem:[#allocation9 + $0x34] sm:$0xf]
      %v852 = vld [vmem:[#allocation9 + $0x38] sm:$0xf]
      %v853 = vld [vmem:[#allocation9 + $0x3c] sm:$0xf]
      %v854 = vld [vmem:[%s6] sm:$0x1]
      %v856 = vperm.slane %v854, 0
      %v874 = vunpack.c.l.b16 %v838
      %v875 = vunpack.c.l.b16 %v839
      %v876 = vunpack.c.l.b16 %v840
      %v877 = vunpack.c.l.b16 %v841
      %v878 = vunpack.c.l.b16 %v842
      %v879 = vunpack.c.l.b16 %v843
      %v880 = vunpack.c.l.b16 %v844
      %v881 = vunpack.c.l.b16 %v845
      %v882 = vunpack.c.l.b16 %v846
      %v883 = vunpack.c.l.b16 %v847
      %v884 = vunpack.c.l.b16 %v848
      %v885 = vunpack.c.l.b16 %v849
      %v886 = vunpack.c.l.b16 %v850
      %v887 = vunpack.c.l.b16 %v851
      %v888 = vunpack.c.l.b16 %v852
      %v889 = vunpack.c.l.b16 %v853
      %v890 = vpack.c.b16 %v875, %v874
      %v891 = vpack.c.b16 %v877, %v876
      %v892 = vpack.c.b16 %v879, %v878
      %v893 = vpack.c.b16 %v881, %v880
      %v894 = vpack.c.b16 %v883, %v882
      %v895 = vpack.c.b16 %v885, %v884
      %v896 = vpack.c.b16 %v887, %v886
      %v897 = vpack.c.b16 %v889, %v888
      %906 = vmatpush.bf16.msra.mxu0 %v897
      %907 = vmatpush.bf16.msra.mxu0 %v896
      %908 = vmatpush.bf16.msra.mxu0 %v895
      %909 = vmatpush.bf16.msra.mxu0 %v894
      %910 = vmatpush.bf16.msra.mxu0 %v893
      %911 = vmatpush.bf16.msra.mxu0 %v892
      %912 = vmatpush.bf16.msra.mxu0 %v891
      %913 = vmatpush.bf16.msra.mxu0 %v890
      %914 = vmatmul.bf16.gmra.mxu0 %v837
      %v915 = vpop.f32.mrf.mxu0
      %v916 = vadd.f32 %v856, %v915
      %v917 = vpop.f32.mrf.mxu0
      %918 = vdwg.mxu0
      %919 = vst [vmem:[#allocation11] sm:$0xff] %v916
    $region53: #{tpu_custom_call.1} parent=1 // pred_fallthru
      _
    // Predicated region
    $region54: #{tpu_custom_call.1} parent=1 // pred_check
      _
    $region55: #{tpu_custom_call.1} parent=1 // pred_check_branch
      %921 = sbr.rel (0) target = $region57
    $region56: #{tpu_custom_call.1} parent=1 // pred_region
      %923 = vsyncadd [#allocation5], 0
      %s925 = sshll.u32 [#allocation11], 4
      %s926 = int_to_ptr.vmem [resolvable:$true] %s925
      %s927 = sshll.u32 %s7, 4
      %s928 = int_to_ptr.hbm [resolvable:$true] %s927
      %930 = dma.vmem_to_hbm [thread:$0]  %s926, 128, %s928, [#allocation5]
    $region57: #{tpu_custom_call.1} parent=1 // pred_fallthru
      _
    // Predicated region
    $region58: #{tpu_custom_call.1} parent=1 // pred_check
      _
    $region59: #{tpu_custom_call.1} parent=1 // pred_check_branch
      %932 = sbr.rel (0) target = $region61
    $region60: #{tpu_custom_call.1} parent=1 // pred_region
      %934 = dma.done [#allocation5], 128
    $region61: #{tpu_custom_call.1} parent=1 // pred_fallthru
      _
    %935 = vsyncpa [#allocation4], 1
    %936 = vsyncpa [#allocation7], 1
    %937 = vsyncpa [#allocation10], 1
    %938 = vsyncpa [#allocation5], 1

</llo_original>
